<compile_context>
chip_gen: v7x
topology: tpu7x:2x2x1
jax: 0.10.0
libtpu: 0.0.40
codegen_flags: <defaults>
</compile_context>

<pallas_src>
import jax
import jax.numpy as jnp
from jax.experimental import pallas as pl
from jax.experimental.pallas import tpu as pltpu


# --------------------------------------------------------------------------- #
# Kernels
# --------------------------------------------------------------------------- #
def _collapsed_kernel(x_ref, y_ref, wx_ref, wy_ref, b_ref, o_ref):
    """out_tile = x_tile @ Wx + y_tile @ Wy + b   (f32 accumulation on the MXU)."""
    cd = wx_ref.dtype
    acc = jnp.dot(x_ref[...].astype(cd), wx_ref[...],
                  preferred_element_type=jnp.float32)
    acc = acc + jnp.dot(y_ref[...].astype(cd), wy_ref[...],
                        preferred_element_type=jnp.float32)
    o_ref[...] = (acc + b_ref[...]).astype(o_ref.dtype)


def _factored_kernel(x_ref, y_ref, w1x_ref, w1y_ref, b1_ref, w2_ref, b2_ref, o_ref):
    """Two-linear form (used when the affine collapse would be a pessimization)."""
    cd = w1x_ref.dtype
    h = jnp.dot(x_ref[...].astype(cd), w1x_ref[...],
                preferred_element_type=jnp.float32)
    h = h + jnp.dot(y_ref[...].astype(cd), w1y_ref[...],
                    preferred_element_type=jnp.float32)
    h = h + b1_ref[...]
    # TODO(synk): insert the configured activation / norm here if the module is
    # ever built with act/norm != None (the collapsed path is already guarded off).
    acc = jnp.dot(h.astype(w2_ref.dtype), w2_ref[...],
                  preferred_element_type=jnp.float32)
    o_ref[...] = (acc + b2_ref[...]).astype(o_ref.dtype)


# --------------------------------------------------------------------------- #
# One-time parameter preparation (hoisted out of the hot per-call path)
# --------------------------------------------------------------------------- #
def prepare_linear_rec_noise_params(w1, b1, w2, b2, dx, *, act=None, norm=None,
                                    compute_dtype=jnp.bfloat16):
    """Prepare (and cache) kernel parameters. Call once per weight update.

    w1: (Dx+Dy, H)  first nn.Linear weight, stored transposed;  b1: (H,)
    w2: (H, Dout)   second nn.Linear weight, stored transposed; b2: (Dout,)
    dx: number of leading columns of concat([x, y]) that belong to x.
    """
    # Guard: the fused kernels (and especially the affine collapse) are only
    # valid for identity activation / norm between the two linears.
    if act is not None or norm is not None:
        raise NotImplementedError(
            "LinearRecNoise Pallas kernel only supports act=None, norm=None")

    K, H = w1.shape
    H2, Dout = w2.shape
    assert H2 == H and b1.shape == (H,) and b2.shape == (Dout,)
    assert 0 < dx < K
    dy = K - dx
    cd = jnp.dtype(compute_dtype)

    # Collapse (z@W1+b1)@W2+b2 into one affine map only when the collapsed weight
    # (K x Dout) is no bigger than the factored pair (H x (K+Dout)); otherwise
    # the collapse costs MORE FLOPs and a bigger resident weight.
    if K * Dout <= H * (K + Dout):
        w1f, w2f = w1.astype(jnp.float32), w2.astype(jnp.float32)
        w_eff = jnp.dot(w1f, w2f, preferred_element_type=jnp.float32)   # (K, Dout)
        b_eff = jnp.dot(b1.astype(jnp.float32), w2f) + b2.astype(jnp.float32)
        return dict(mode="collapsed", dx=dx, dy=dy, dout=Dout,
                    wx=w_eff[:dx].astype(cd),          # (Dx, Dout) resident
                    wy=w_eff[dx:].astype(cd),          # (Dy, Dout) resident
                    b=b_eff.reshape(1, Dout))          # f32 bias (post-accum add)
    else:
        return dict(mode="factored", dx=dx, dy=dy, dout=Dout,
                    w1x=w1[:dx].astype(cd), w1y=w1[dx:].astype(cd),
                    b1=b1.astype(jnp.float32).reshape(1, H),
                    w2=w2.astype(cd),
                    b2=b2.astype(jnp.float32).reshape(1, Dout))


# --------------------------------------------------------------------------- #
# Tiling helpers
# --------------------------------------------------------------------------- #
def _derive_tile_b(B, per_row_stream_bytes, resident_bytes, sublane,
                   vmem_budget, max_tile_b):
    """Largest sublane-multiple batch tile whose double-buffered streamed blocks
    (+ conservatively double-buffered resident weights) fit the VMEM budget."""
    avail = max(vmem_budget - 2 * resident_bytes,
                2 * sublane * per_row_stream_bytes)
    tb = avail // (2 * per_row_stream_bytes)        # streamed blocks: 2 buffers
    tb = max((tb // sublane) * sublane, sublane)
    tb = min(tb, max_tile_b)
    # v7x has 2 TensorCores sharing the "parallel" grid axis: once the batch is
    # big enough, keep >= 2 grid steps so both cores get work (harmless on v5e/v6e).
    if B >= 1024:
        half = pl.cdiv(pl.cdiv(B, 2), sublane) * sublane
        tb = min(tb, half)
    if tb >= B:
        tb = B
    return int(tb)


# --------------------------------------------------------------------------- #
# Hot-path forward
# --------------------------------------------------------------------------- #
def linear_rec_noise_forward(x, y, params, *, out_dtype=None,
                             max_tile_b=2048,
                             vmem_budget=40 * 1024 * 1024):
    """LinearRecNoise.forward(x, y): reconstruct from concat([x, y]).

    x: (B, Dx), y: (B, Dy); params from prepare_linear_rec_noise_params.
    vmem_budget defaults to 40 MiB so the footprint fits v7x's 64 MiB VMEM with
    headroom (plenty of slack on v5e/v6e's 128 MiB).
    """
    B, Dx = x.shape
    By, Dy = y.shape
    assert B == By and Dx == params["dx"] and Dy == params["dy"]
    Dout = params["dout"]
    out_dtype = x.dtype if out_dtype is None else out_dtype

    if params["mode"] == "collapsed":
        kernel = _collapsed_kernel
        resident = (params["wx"], params["wy"], params["b"])
        flops = 2 * B * (Dx + Dy) * Dout
    else:
        kernel = _factored_kernel
        resident = (params["w1x"], params["w1y"], params["b1"],
                    params["w2"], params["b2"])
        H = params["w2"].shape[0]
        flops = 2 * B * H * (Dx + Dy + Dout)
    # TODO(synk): for very large K*Dout (resident weight >> VMEM budget) add an
    # output (Dout) grid axis so the weight block becomes (K, tn).

    resident_bytes = sum(int(r.size) * r.dtype.itemsize for r in resident)
    per_row_stream = (Dx * x.dtype.itemsize + Dy * y.dtype.itemsize
                      + Dout * jnp.dtype(out_dtype).itemsize)
    stream_itemsize = min(x.dtype.itemsize, y.dtype.itemsize,
                          jnp.dtype(out_dtype).itemsize)
    sublane = 8 * (4 // stream_itemsize)            # 8 (f32) / 16 (bf16) / 32 (8-bit)

    tb = _derive_tile_b(B, per_row_stream, resident_bytes, sublane,
                        vmem_budget, max_tile_b)
    grid = (pl.cdiv(B, tb),)

    footprint = 2 * resident_bytes + 2 * tb * per_row_stream
    vmem_limit = int(min(max(footprint + footprint // 4 + (4 << 20), 16 << 20),
                         60 << 20))

    bytes_accessed = (x.size * x.dtype.itemsize + y.size * y.dtype.itemsize
                      + resident_bytes
                      + B * Dout * jnp.dtype(out_dtype).itemsize)
    cost = pl.CostEstimate(flops=int(flops), transcendentals=0,
                           bytes_accessed=int(bytes_accessed))

    def call(weight_mode):
        def rspec(r):
            idx = lambda i: (0,) * r.ndim           # resident: constant block index
            if weight_mode is None:
                return pl.BlockSpec(r.shape, idx)
            return pl.BlockSpec(r.shape, idx, pipeline_mode=weight_mode)

        return pl.pallas_call(
            kernel,
            out_shape=jax.ShapeDtypeStruct((B, Dout), out_dtype),
            grid=grid,
            in_specs=[
                pl.BlockSpec((tb, Dx), lambda i: (i, 0)),    # streamed x tile
                pl.BlockSpec((tb, Dy), lambda i: (i, 0)),    # streamed y tile
                *[rspec(r) for r in resident],               # resident weights/bias
            ],
            out_specs=pl.BlockSpec((tb, Dout), lambda i: (i, 0)),
            compiler_params=pltpu.CompilerParams(
                dimension_semantics=("parallel",),
                vmem_limit_bytes=vmem_limit,
            ),
            cost_estimate=cost,
        )(x, y, *resident)

    try:
        # Resident weights/bias are fetched once (constant index_map): single-
        # buffer them so their VMEM isn't doubled (frees budget for larger tb).
        return call(pl.Buffered(1))
    except Exception:
        # If this JAX build rejects buffer_count=1 on the pallas_call pipeline,
        # fall back to default double-buffered resident blocks (correct, just
        # uses more VMEM — the budget above already accounts for 2x).
        return call(None)


# --------------------------------------------------------------------------- #
# Reference + demo
# --------------------------------------------------------------------------- #
def reference_forward(x, y, w1, b1, w2, b2):
    z = jnp.concatenate([x.astype(jnp.float32), y.astype(jnp.float32)], axis=1)
    h = z @ w1 + b1
    return h @ w2 + b2


def _torch_linear_init(key, in_f, out_f):
    """nn.Linear default init (uniform +-1/sqrt(in_f)); weight stored transposed."""
    kw, kb = jax.random.split(key)
    bound = 1.0 / jnp.sqrt(jnp.float32(in_f))
    w = jax.random.uniform(kw, (in_f, out_f), jnp.float32, -bound, bound)
    b = jax.random.uniform(kb, (out_f,), jnp.float32, -bound, bound)
    return w, b


if __name__ == "__main__":
    key = jax.random.PRNGKey(0)

    def run_case(B, Dx, Dy, H, Dout, expect_mode, subkey, max_tile_b):
        kx, ky, k1, k2 = jax.random.split(subkey, 4)
        x = jax.random.normal(kx, (B, Dx), jnp.float32)
        y = jax.random.normal(ky, (B, Dy), jnp.float32)
        # Two nn.Linear layers (act=None, norm=None, h=[H, H]):
        #   Linear(Dx+Dy, H), Linear(H, Dout)
        w1, b1 = _torch_linear_init(k1, Dx + Dy, H)
        w2, b2 = _torch_linear_init(k2, H, Dout)

        # Activations arrive in bf16 (typical pipeline) -> streamed at half the
        # HBM bytes; the reference uses the same bf16-quantized values in f32.
        xb = x.astype(jnp.bfloat16)
        yb = y.astype(jnp.bfloat16)

        params = prepare_linear_rec_noise_params(w1, b1, w2, b2, dx=Dx)
        assert params["mode"] == expect_mode, params["mode"]

        out = linear_rec_noise_forward(xb, yb, params, out_dtype=jnp.float32,
                                       max_tile_b=max_tile_b)
        out = jax.block_until_ready(out)

        ref = reference_forward(xb, yb, w1, b1, w2, b2)
        assert out.shape == (B, Dout)
        err = float(jnp.max(jnp.abs(out - ref)))
        # bf16 weights / MXU operands with f32 accumulation -> small drift.
        assert jnp.allclose(out, ref, atol=2e-2, rtol=2e-2), (expect_mode, err)

    ka, kb = jax.random.split(key)
    # Case 1: collapse profitable (K*Dout=512 <= H*(K+Dout)=1536). max_tile_b=16
    # forces a 2-step batch grid so the pipelined/streamed path is exercised.
    run_case(B=32, Dx=16, Dy=16, H=32, Dout=16, expect_mode="collapsed",
             subkey=ka, max_tile_b=16)
    # Case 2: wide K/Dout with narrow H, where collapsing would be a
    # pessimization (K*Dout=32768 > H*(K+Dout)=12288) -> factored kernel.
    run_case(B=32, Dx=128, Dy=128, H=32, Dout=128, expect_mode="factored",
             subkey=kb, max_tile_b=16)

    print("KERNEL_OK")
</pallas_src>

<mosaic_0001>
module attributes {stable_mosaic.version = 11 : i64} {
  func.func @_collapsed_kernel(%arg0: i32, %arg1: memref<16x16xbf16, #tpu.memory_space<vmem>>, %arg2: memref<16x16xbf16, #tpu.memory_space<vmem>>, %arg3: memref<16x16xbf16, #tpu.memory_space<vmem>>, %arg4: memref<16x16xbf16, #tpu.memory_space<vmem>>, %arg5: memref<1x16xf32, #tpu.memory_space<vmem>>, %arg6: memref<16x16xf32, #tpu.memory_space<vmem>>) attributes {dimension_semantics = [#tpu.dimension_semantics<parallel>], iteration_bounds = array<i64: 2>, scalar_prefetch = 0 : i64, scratch_operands = 0 : i64, tpu.core_type = #tpu.core_type<tc>, window_params = [{transform_indices = @transform_0, window_bounds = array<i64: 16, 16>}, {transform_indices = @transform_1, window_bounds = array<i64: 16, 16>}, {pipeline_mode = #tpu.pipeline_mode<synchronous>, transform_indices = @transform_2, window_bounds = array<i64: 16, 16>}, {pipeline_mode = #tpu.pipeline_mode<synchronous>, transform_indices = @transform_3, window_bounds = array<i64: 16, 16>}, {pipeline_mode = #tpu.pipeline_mode<synchronous>, transform_indices = @transform_4, window_bounds = array<i64: 1, 16>}, {transform_indices = @transform_5, window_bounds = array<i64: 16, 16>}]} {
    %c0 = arith.constant 0 : index
    %c0_0 = arith.constant 0 : index
    %0 = vector.load %arg1[%c0, %c0_0] : memref<16x16xbf16, #tpu.memory_space<vmem>>, vector<16x16xbf16>
    %c0_1 = arith.constant 0 : index
    %c0_2 = arith.constant 0 : index
    %1 = vector.load %arg3[%c0_1, %c0_2] : memref<16x16xbf16, #tpu.memory_space<vmem>>, vector<16x16xbf16>
    %cst = arith.constant dense<0.000000e+00> : vector<16x16xf32>
    %2 = tpu.matmul %0, %1, %cst {dimension_numbers = #tpu.dot_dimension_numbers<[1], [0], [0], [1], [0, 0, 1, 1], [], []>} : vector<16x16xbf16>, vector<16x16xbf16>, vector<16x16xf32> -> vector<16x16xf32>
    %c0_3 = arith.constant 0 : index
    %c0_4 = arith.constant 0 : index
    %3 = vector.load %arg2[%c0_3, %c0_4] : memref<16x16xbf16, #tpu.memory_space<vmem>>, vector<16x16xbf16>
    %c0_5 = arith.constant 0 : index
    %c0_6 = arith.constant 0 : index
    %4 = vector.load %arg4[%c0_5, %c0_6] : memref<16x16xbf16, #tpu.memory_space<vmem>>, vector<16x16xbf16>
    %cst_7 = arith.constant dense<0.000000e+00> : vector<16x16xf32>
    %5 = tpu.matmul %3, %4, %cst_7 {dimension_numbers = #tpu.dot_dimension_numbers<[1], [0], [0], [1], [0, 0, 1, 1], [], []>} : vector<16x16xbf16>, vector<16x16xbf16>, vector<16x16xf32> -> vector<16x16xf32>
    %6 = arith.addf %2, %5 : vector<16x16xf32>
    %c0_8 = arith.constant 0 : index
    %c0_9 = arith.constant 0 : index
    %7 = vector.load %arg5[%c0_8, %c0_9] : memref<1x16xf32, #tpu.memory_space<vmem>>, vector<1x16xf32>
    %8 = vector.broadcast %7 : vector<1x16xf32> to vector<16x16xf32>
    %9 = arith.addf %6, %8 : vector<16x16xf32>
    %c0_10 = arith.constant 0 : index
    %c0_11 = arith.constant 0 : index
    %10 = vector.load %arg6[%c0_10, %c0_11] : memref<16x16xf32, #tpu.memory_space<vmem>>, vector<16x16xf32>
    tpu.vector_store %arg6[%c0_10, %c0_11], %9 {strides = array<i32>} : memref<16x16xf32, #tpu.memory_space<vmem>>, vector<16x16xf32>,
    return
  }
  func.func @transform_0(%arg0: i32) -> (i32, i32) {
    %c0_i32 = arith.constant 0 : i32
    %c0_i32_0 = arith.constant 0 : i32
    return %arg0, %c0_i32 : i32, i32
  }
  func.func @transform_1(%arg0: i32) -> (i32, i32) {
    %c0_i32 = arith.constant 0 : i32
    %c0_i32_0 = arith.constant 0 : i32
    return %arg0, %c0_i32 : i32, i32
  }
  func.func @transform_2(%arg0: i32) -> (i32, i32) {
    %c0_i32 = arith.constant 0 : i32
    %c0_i32_0 = arith.constant 0 : i32
    %c0_i32_1 = arith.constant 0 : i32
    return %c0_i32, %c0_i32_0 : i32, i32
  }
  func.func @transform_3(%arg0: i32) -> (i32, i32) {
    %c0_i32 = arith.constant 0 : i32
    %c0_i32_0 = arith.constant 0 : i32
    %c0_i32_1 = arith.constant 0 : i32
    return %c0_i32, %c0_i32_0 : i32, i32
  }
  func.func @transform_4(%arg0: i32) -> (i32, i32) {
    %c0_i32 = arith.constant 0 : i32
    %c0_i32_0 = arith.constant 0 : i32
    %c0_i32_1 = arith.constant 0 : i32
    return %c0_i32, %c0_i32_0 : i32, i32
  }
  func.func @transform_5(%arg0: i32) -> (i32, i32) {
    %c0_i32 = arith.constant 0 : i32
    %c0_i32_0 = arith.constant 0 : i32
    return %arg0, %c0_i32 : i32, i32
  }
}

module attributes {stable_mosaic.version = 11 : i64} {
  func.func @_collapsed_kernel(%arg0: i32, %arg1: memref<16x16xbf16, #tpu.memory_space<vmem>>, %arg2: memref<16x16xbf16, #tpu.memory_space<vmem>>, %arg3: memref<16x16xbf16, #tpu.memory_space<vmem>>, %arg4: memref<16x16xbf16, #tpu.memory_space<vmem>>, %arg5: memref<1x16xf32, #tpu.memory_space<vmem>>, %arg6: memref<16x16xf32, #tpu.memory_space<vmem>>) attributes {dimension_semantics = [#tpu.dimension_semantics<parallel>], iteration_bounds = array<i64: 2>, scalar_prefetch = 0 : i64, scratch_operands = 0 : i64, tpu.core_type = #tpu.core_type<tc>, window_params = [{transform_indices = @transform_0, window_bounds = array<i64: 16, 16>}, {transform_indices = @transform_1, window_bounds = array<i64: 16, 16>}, {pipeline_mode = #tpu.pipeline_mode<synchronous>, transform_indices = @transform_2, window_bounds = array<i64: 16, 16>}, {pipeline_mode = #tpu.pipeline_mode<synchronous>, transform_indices = @transform_3, window_bounds = array<i64: 16, 16>}, {pipeline_mode = #tpu.pipeline_mode<synchronous>, transform_indices = @transform_4, window_bounds = array<i64: 1, 16>}, {transform_indices = @transform_5, window_bounds = array<i64: 16, 16>}]} {
    %c0 = arith.constant 0 : index
    %c0_0 = arith.constant 0 : index
    %0 = vector.load %arg1[%c0, %c0_0] : memref<16x16xbf16, #tpu.memory_space<vmem>>, vector<16x16xbf16>
    %c0_1 = arith.constant 0 : index
    %c0_2 = arith.constant 0 : index
    %1 = vector.load %arg3[%c0_1, %c0_2] : memref<16x16xbf16, #tpu.memory_space<vmem>>, vector<16x16xbf16>
    %cst = arith.constant dense<0.000000e+00> : vector<16x16xf32>
    %2 = tpu.matmul %0, %1, %cst {dimension_numbers = #tpu.dot_dimension_numbers<[1], [0], [0], [1], [0, 0, 1, 1], [], []>} : vector<16x16xbf16>, vector<16x16xbf16>, vector<16x16xf32> -> vector<16x16xf32>
    %c0_3 = arith.constant 0 : index
    %c0_4 = arith.constant 0 : index
    %3 = vector.load %arg2[%c0_3, %c0_4] : memref<16x16xbf16, #tpu.memory_space<vmem>>, vector<16x16xbf16>
    %c0_5 = arith.constant 0 : index
    %c0_6 = arith.constant 0 : index
    %4 = vector.load %arg4[%c0_5, %c0_6] : memref<16x16xbf16, #tpu.memory_space<vmem>>, vector<16x16xbf16>
    %cst_7 = arith.constant dense<0.000000e+00> : vector<16x16xf32>
    %5 = tpu.matmul %3, %4, %cst_7 {dimension_numbers = #tpu.dot_dimension_numbers<[1], [0], [0], [1], [0, 0, 1, 1], [], []>} : vector<16x16xbf16>, vector<16x16xbf16>, vector<16x16xf32> -> vector<16x16xf32>
    %6 = arith.addf %2, %5 : vector<16x16xf32>
    %c0_8 = arith.constant 0 : index
    %c0_9 = arith.constant 0 : index
    %7 = vector.load %arg5[%c0_8, %c0_9] : memref<1x16xf32, #tpu.memory_space<vmem>>, vector<1x16xf32>
    %8 = vector.broadcast %7 : vector<1x16xf32> to vector<16x16xf32>
    %9 = arith.addf %6, %8 : vector<16x16xf32>
    %c0_10 = arith.constant 0 : index
    %c0_11 = arith.constant 0 : index
    %10 = vector.load %arg6[%c0_10, %c0_11] : memref<16x16xf32, #tpu.memory_space<vmem>>, vector<16x16xf32>
    tpu.vector_store %arg6[%c0_10, %c0_11], %9 {strides = array<i32>} : memref<16x16xf32, #tpu.memory_space<vmem>>, vector<16x16xf32>,
    return
  }
  func.func @transform_0(%arg0: i32) -> (i32, i32) {
    %c0_i32 = arith.constant 0 : i32
    %c0_i32_0 = arith.constant 0 : i32
    return %arg0, %c0_i32 : i32, i32
  }
  func.func @transform_1(%arg0: i32) -> (i32, i32) {
    %c0_i32 = arith.constant 0 : i32
    %c0_i32_0 = arith.constant 0 : i32
    return %arg0, %c0_i32 : i32, i32
  }
  func.func @transform_2(%arg0: i32) -> (i32, i32) {
    %c0_i32 = arith.constant 0 : i32
    %c0_i32_0 = arith.constant 0 : i32
    %c0_i32_1 = arith.constant 0 : i32
    return %c0_i32, %c0_i32_0 : i32, i32
  }
  func.func @transform_3(%arg0: i32) -> (i32, i32) {
    %c0_i32 = arith.constant 0 : i32
    %c0_i32_0 = arith.constant 0 : i32
    %c0_i32_1 = arith.constant 0 : i32
    return %c0_i32, %c0_i32_0 : i32, i32
  }
  func.func @transform_4(%arg0: i32) -> (i32, i32) {
    %c0_i32 = arith.constant 0 : i32
    %c0_i32_0 = arith.constant 0 : i32
    %c0_i32_1 = arith.constant 0 : i32
    return %c0_i32, %c0_i32_0 : i32, i32
  }
  func.func @transform_5(%arg0: i32) -> (i32, i32) {
    %c0_i32 = arith.constant 0 : i32
    %c0_i32_0 = arith.constant 0 : i32
    return %arg0, %c0_i32 : i32, i32
  }
}

</mosaic_0001>

<llo_original>
// kernel: tpu_custom_call.1
$region0: #{tpu_custom_call.1}
  #allocation0 [shape = 'u32[]', space=smem, size = 0x4, offset = 0x4, fixed_abs, tag = 'smem constant byte address 0x4 - core index']
  #allocation1 [shape = 'u32[144,128]{1,0:T(1,128)}', space=vmem, size = 0x12000, scoped, tag = 'internal scratch']
  %s0 = inlined_call_operand.vmem [shape: bf16[32,16], index: 0, kind: input, shape index: {}]
  %s1 = inlined_call_operand.vmem [shape: bf16[32,16], index: 1, kind: input, shape index: {}]
  %s2 = inlined_call_operand.vmem [shape: bf16[16,16], index: 2, kind: input, shape index: {}]
  %s3 = inlined_call_operand.vmem [shape: bf16[16,16], index: 3, kind: input, shape index: {}]
  %s4 = inlined_call_operand.vmem [shape: f32[1,16], index: 4, kind: input, shape index: {}]
  %s5 = inlined_call_operand.vmem [shape: f32[32,16], index: 5, kind: output, shape index: {}]
  %s6 = sld [smem:[#allocation0]]
  $region53: #{tpu_custom_call.1} parent=0
    _
  %s8 = ssub.s32 1, %s6
  %s9 = scalar_select 0, %s8, %s6
  loop: start=0, step=1, limit=4
  $region2: #{tpu_custom_call.1} parent=0 // loop_pre_header
    _
  $region3: #{tpu_custom_call.1} parent=0 // loop_header
    %s11 = sphi 0, %s15
    %p12 = scmp.ge.s32.totalorder %s11, 4
    %s21 = sphi 0, %s23
    %s24 = sphi 0, %s21
    %s25 = sphi 0, %s24
    %s41 = sphi 0, %s25
    %s47 = sphi 0, %s49
    %s50 = sphi 0, %s47
    %s51 = sphi 0, %s50
    %s67 = sphi 0, %s51
    %s71 = sphi 0, %s71
    %s73 = sphi 0, %s71
    %s74 = sphi 0, %s73
    %s88 = sphi 0, %s74
    %s92 = sphi 0, %s92
    %s94 = sphi 0, %s92
    %s95 = sphi 0, %s94
    %s109 = sphi 0, %s95
    %s113 = sphi 0, %s113
    %s115 = sphi 0, %s113
    %s116 = sphi 0, %s115
    %s130 = sphi 0, %s116
    %s136 = sphi 0, %s138
    %s139 = sphi 0, %s136
    %s140 = sphi 0, %s139
    %s156 = sphi 0, %s140
  $region4: #{tpu_custom_call.1} parent=0 // loop_header_branch
    %14 = sbr.rel (%p12) target = $region8
  $region5: #{tpu_custom_call.1} parent=0 // loop_body
    %s16 = ssub.s32 %s11, 1
    %s17 = ssub.s32 %s11, 2
    %s18 = sadd.s32 %s11, 1
    %s19 = ssub.s32 %s11, %s18
    %p20 = scmp.eq.s32.totalorder %s19, 0
    %s22 = sadd.s32 %s21, 1
    %s23 = scalar_select %p20, %s21, %s22
    %p26 = pneg %p20
    %p27 = scmp.eq.s32.totalorder %s11, 1
    %p28 = por %p26, %p27
    %p29 = scmp.ne.s32.totalorder %s21, %s24
    %p30 = scmp.eq.s32.totalorder %s11, 0
    %p31 = por %p29, %p30
    %p32 = scmp.ne.s32.totalorder %s21, %s24
    %p33 = scmp.eq.s32.totalorder %s16, 1
    %p34 = por %p32, %p33
    %p35 = scmp.ne.s32.totalorder %s24, %s25
    %p36 = scmp.eq.s32.totalorder %s16, 0
    %p37 = por %p35, %p36
    %p38 = scmp.ne.s32.totalorder %s24, %s25
    %p39 = scmp.eq.s32.totalorder %s17, 1
    %p40 = por %p38, %p39
    %p42 = scmp.ne.s32.totalorder %s25, %s41
    %p43 = scmp.eq.s32.totalorder %s17, 0
    %p44 = por %p42, %p43
    %s45 = ssub.s32 %s11, %s18
    %p46 = scmp.eq.s32.totalorder %s45, 0
    %s48 = sadd.s32 %s47, 1
    %s49 = scalar_select %p46, %s47, %s48
    %p52 = pneg %p46
    %p53 = scmp.eq.s32.totalorder %s11, 1
    %p54 = por %p52, %p53
    %p55 = scmp.ne.s32.totalorder %s47, %s50
    %p56 = scmp.eq.s32.totalorder %s11, 0
    %p57 = por %p55, %p56
    %p58 = scmp.ne.s32.totalorder %s47, %s50
    %p59 = scmp.eq.s32.totalorder %s16, 1
    %p60 = por %p58, %p59
    %p61 = scmp.ne.s32.totalorder %s50, %s51
    %p62 = scmp.eq.s32.totalorder %s16, 0
    %p63 = por %p61, %p62
    %p64 = scmp.ne.s32.totalorder %s50, %s51
    %p65 = scmp.eq.s32.totalorder %s17, 1
    %p66 = por %p64, %p65
    %p68 = scmp.ne.s32.totalorder %s51, %s67
    %p69 = scmp.eq.s32.totalorder %s17, 0
    %p70 = por %p68, %p69
    %s72 = sadd.s32 %s71, 1
    %p75 = scmp.eq.s32.totalorder %s11, 1
    %p76 = scmp.ne.s32.totalorder %s71, %s73
    %p77 = scmp.eq.s32.totalorder %s11, 0
    %p78 = por %p76, %p77
    %p79 = scmp.ne.s32.totalorder %s71, %s73
    %p80 = scmp.eq.s32.totalorder %s16, 1
    %p81 = por %p79, %p80
    %p82 = scmp.ne.s32.totalorder %s73, %s74
    %p83 = scmp.eq.s32.totalorder %s16, 0
    %p84 = por %p82, %p83
    %p85 = scmp.ne.s32.totalorder %s73, %s74
    %p86 = scmp.eq.s32.totalorder %s17, 1
    %p87 = por %p85, %p86
    %p89 = scmp.ne.s32.totalorder %s74, %s88
    %p90 = scmp.eq.s32.totalorder %s17, 0
    %p91 = por %p89, %p90
    %s93 = sadd.s32 %s92, 1
    %p96 = scmp.eq.s32.totalorder %s11, 1
    %p97 = scmp.ne.s32.totalorder %s92, %s94
    %p98 = scmp.eq.s32.totalorder %s11, 0
    %p99 = por %p97, %p98
    %p100 = scmp.ne.s32.totalorder %s92, %s94
    %p101 = scmp.eq.s32.totalorder %s16, 1
    %p102 = por %p100, %p101
    %p103 = scmp.ne.s32.totalorder %s94, %s95
    %p104 = scmp.eq.s32.totalorder %s16, 0
    %p105 = por %p103, %p104
    %p106 = scmp.ne.s32.totalorder %s94, %s95
    %p107 = scmp.eq.s32.totalorder %s17, 1
    %p108 = por %p106, %p107
    %p110 = scmp.ne.s32.totalorder %s95, %s109
    %p111 = scmp.eq.s32.totalorder %s17, 0
    %p112 = por %p110, %p111
    %s114 = sadd.s32 %s113, 1
    %p117 = scmp.eq.s32.totalorder %s11, 1
    %p118 = scmp.ne.s32.totalorder %s113, %s115
    %p119 = scmp.eq.s32.totalorder %s11, 0
    %p120 = por %p118, %p119
    %p121 = scmp.ne.s32.totalorder %s113, %s115
    %p122 = scmp.eq.s32.totalorder %s16, 1
    %p123 = por %p121, %p122
    %p124 = scmp.ne.s32.totalorder %s115, %s116
    %p125 = scmp.eq.s32.totalorder %s16, 0
    %p126 = por %p124, %p125
    %p127 = scmp.ne.s32.totalorder %s115, %s116
    %p128 = scmp.eq.s32.totalorder %s17, 1
    %p129 = por %p127, %p128
    %p131 = scmp.ne.s32.totalorder %s116, %s130
    %p132 = scmp.eq.s32.totalorder %s17, 0
    %p133 = por %p131, %p132
    %s134 = ssub.s32 %s11, %s18
    %p135 = scmp.eq.s32.totalorder %s134, 0
    %s137 = sadd.s32 %s136, 1
    %s138 = scalar_select %p135, %s136, %s137
    %p141 = pneg %p135
    %p142 = scmp.eq.s32.totalorder %s11, 1
    %p143 = por %p141, %p142
    %p144 = scmp.ne.s32.totalorder %s136, %s139
    %p145 = scmp.eq.s32.totalorder %s11, 0
    %p146 = por %p144, %p145
    %p147 = scmp.ne.s32.totalorder %s136, %s139
    %p148 = scmp.eq.s32.totalorder %s16, 1
    %p149 = por %p147, %p148
    %p150 = scmp.ne.s32.totalorder %s139, %s140
    %p151 = scmp.eq.s32.totalorder %s16, 0
    %p152 = por %p150, %p151
    %p153 = scmp.ne.s32.totalorder %s139, %s140
    %p154 = scmp.eq.s32.totalorder %s17, 1
    %p155 = por %p153, %p154
    %p157 = scmp.ne.s32.totalorder %s140, %s156
    %p158 = scmp.eq.s32.totalorder %s17, 0
    %p159 = por %p157, %p158
    %p160 = scmp.le.s32.totalorder 1, %s11
    %p161 = scmp.lt.s32.totalorder %s11, 3
    %p162 = pnand %p160, %p161
    %p163 = pneg %p162
    // Predicated region
    $region9: #{tpu_custom_call.1} parent=5 // pred_check
      _
    $region10: #{tpu_custom_call.1} parent=5 // pred_check_branch
      %165 = sbr.rel (%p162) target = $region12
    $region11: #{tpu_custom_call.1} parent=5 // pred_region
      %s166 = ssub.s32 %s11, 1
      // Predicated region
      $region13: #{tpu_custom_call.1} parent=11 // pred_check
        %p167 = pneg %p84
      $region14: #{tpu_custom_call.1} parent=11 // pred_check_branch
        %169 = sbr.rel (%p167) target = $region16
      $region15: #{tpu_custom_call.1} parent=11 // pred_region
        _
      $region16: #{tpu_custom_call.1} parent=11 // pred_fallthru
        _
      // Predicated region
      $region17: #{tpu_custom_call.1} parent=11 // pred_check
        %p170 = pneg %p105
      $region18: #{tpu_custom_call.1} parent=11 // pred_check_branch
        %172 = sbr.rel (%p170) target = $region20
      $region19: #{tpu_custom_call.1} parent=11 // pred_region
        _
      $region20: #{tpu_custom_call.1} parent=11 // pred_fallthru
        _
      // Predicated region
      $region21: #{tpu_custom_call.1} parent=11 // pred_check
        %p173 = pneg %p126
      $region22: #{tpu_custom_call.1} parent=11 // pred_check_branch
        %175 = sbr.rel (%p173) target = $region24
      $region23: #{tpu_custom_call.1} parent=11 // pred_region
        _
      $region24: #{tpu_custom_call.1} parent=11 // pred_fallthru
        _
    $region12: #{tpu_custom_call.1} parent=5 // pred_fallthru
      _
    %p176 = scmp.lt.s32.totalorder %s11, 2
    // Predicated region
    $region25: #{tpu_custom_call.1} parent=5 // pred_check
      %p177 = pneg %p176
    $region26: #{tpu_custom_call.1} parent=5 // pred_check_branch
      %179 = sbr.rel (%p177) target = $region28
    $region27: #{tpu_custom_call.1} parent=5 // pred_region
      // Predicated region
      $region29: #{tpu_custom_call.1} parent=27 // pred_check
        %p180 = pneg %p31
      $region30: #{tpu_custom_call.1} parent=27 // pred_check_branch
        %182 = sbr.rel (%p180) target = $region32
      $region31: #{tpu_custom_call.1} parent=27 // pred_region
        %s183 = smul.u32 2, %s11
        %p184 = scmp.lt.s32.totalorder %s183, 3
        %s185 = scalar_select %p184, %s183, 3
        %s186 = smul.addr %s185, 4
        %s187 = scalar_lea.vmem %s0, %s186
        %s188 = smul.u32 2, %s11
      $region32: #{tpu_custom_call.1} parent=27 // pred_fallthru
        _
      // Predicated region
      $region33: #{tpu_custom_call.1} parent=27 // pred_check
        %p189 = pneg %p57
      $region34: #{tpu_custom_call.1} parent=27 // pred_check_branch
        %191 = sbr.rel (%p189) target = $region36
      $region35: #{tpu_custom_call.1} parent=27 // pred_region
        %s192 = smul.u32 2, %s11
        %p193 = scmp.lt.s32.totalorder %s192, 3
        %s194 = scalar_select %p193, %s192, 3
        %s195 = smul.addr %s194, 4
        %s196 = scalar_lea.vmem %s1, %s195
        %s197 = smul.u32 2, %s11
      $region36: #{tpu_custom_call.1} parent=27 // pred_fallthru
        _
    $region28: #{tpu_custom_call.1} parent=5 // pred_fallthru
      _
    %p198 = scmp.le.s32.totalorder 1, %s11
    %p199 = scmp.lt.s32.totalorder %s11, 3
    %p200 = pnand %p198, %p199
    %p201 = pneg %p200
    // Predicated region
    $region37: #{tpu_custom_call.1} parent=5 // pred_check
      _
    $region38: #{tpu_custom_call.1} parent=5 // pred_check_branch
      %203 = sbr.rel (%p200) target = $region40
    $region39: #{tpu_custom_call.1} parent=5 // pred_region
      %s204 = ssub.s32 %s11, 1
      %s205 = smul.u32 2, %s16
      %p206 = scmp.lt.s32.totalorder %s205, 3
      %s207 = scalar_select %p206, %s205, 3
      %s208 = smul.addr %s207, 4
      %s209 = scalar_lea.vmem %s0, %s208
      %p210 = pneg %p37
      %p211 = pneg %p34
      %s212 = smul.u32 2, %s16
      %p213 = scmp.lt.s32.totalorder %s212, 3
      %s214 = scalar_select %p213, %s212, 3
      %s215 = smul.addr %s214, 4
      %s216 = scalar_lea.vmem %s1, %s215
      %p217 = pneg %p63
      %p218 = pneg %p60
      %p219 = pneg %p84
      %p220 = pneg %p81
      %p221 = pneg %p105
      %p222 = pneg %p102
      %p223 = pneg %p126
      %p224 = pneg %p123
      %p225 = pneg %p152
      %p226 = pneg %p149
      %s227 = smul.u32 2, %s16
      %p228 = scmp.lt.s32.totalorder %s227, 3
      %s229 = scalar_select %p228, %s227, 3
      %s230 = smul.addr %s229, 8
      %s231 = scalar_lea.vmem %s5, %s230
      %s232 = smul.u32 2, %s16
      %p233 = scmp.lt.s32.totalorder %s232, 3
      %s234 = scalar_select %p233, %s232, 3
      %s235 = smul.addr %s234, 4
      %s236 = scalar_lea.vmem %s0, %s235
      %s237 = smul.u32 2, %s16
      %s238 = smul.u32 2, %s16
      %p239 = scmp.lt.s32.totalorder %s238, 3
      %s240 = scalar_select %p239, %s238, 3
      %s241 = smul.addr %s240, 4
      %s242 = scalar_lea.vmem %s1, %s241
      %s243 = smul.u32 2, %s16
      %s244 = smul.u32 2, %s16
      %p245 = scmp.lt.s32.totalorder %s244, 3
      %s246 = scalar_select %p245, %s244, 3
      %s247 = smul.addr %s246, 8
      %s248 = scalar_lea.vmem %s5, %s247
      %s249 = smul.u32 2, %s16
      %v251 = vld [vmem:[%s236] sm:$0xf]
      %v252 = vld [vmem:[%s236 + $0x4] sm:$0xf]
      %v253 = vld [vmem:[%s2] sm:$0xf]
      %v254 = vld [vmem:[%s2 + $0x4] sm:$0xf]
      %v255 = vld [vmem:[%s242] sm:$0xf]
      %v256 = vld [vmem:[%s242 + $0x4] sm:$0xf]
      %v257 = vld [vmem:[%s3] sm:$0xf]
      %v258 = vld [vmem:[%s3 + $0x4] sm:$0xf]
      %v261 = vunpack.c.l.b16 %v255
      %v262 = vunpack.c.l.b16 %v256
      %v263 = vpack.c.b16 %v262, %v261
      %v266 = vunpack.c.l.b16 %v257
      %v267 = vunpack.c.l.b16 %v258
      %v268 = vpack.c.b16 %v267, %v266
      %vm270 = vcmask 130048
      %v272 = vsel %vm270, %v263, 0
      %274 = vmatprep.subr.bf16.mxu0 0
      %275 = vmatpush1.bf16.msra.mxu0 %v268
      %276 = vmatprep.subr.bf16.mxu0 0
      %277 = vmatpush1.bf16.msra.mxu0 0
      %278 = vmatprep.subr.bf16.mxu0 0
      %279 = vmatpush1.bf16.msra.mxu0 0
      %280 = vmatprep.subr.bf16.mxu0 0
      %281 = vmatpush1.bf16.msra.mxu0 0
      %282 = vmatprep.subr.bf16.mxu0 0
      %283 = vmatpush1.bf16.msra.mxu0 0
      %284 = vmatprep.subr.bf16.mxu0 0
      %285 = vmatpush1.bf16.msra.mxu0 0
      %286 = vmatprep.subr.bf16.mxu0 0
      %287 = vmatpush1.bf16.msra.mxu0 0
      %288 = vmatprep.subr.bf16.mxu0 0
      %289 = vmatpush1.bf16.msra.mxu0 0
      %290 = vmatprep.subr.bf16.mxu0 0
      %291 = vmatpush1.bf16.msra.mxu0 0
      %292 = vmatprep.subr.bf16.mxu0 0
      %293 = vmatpush1.bf16.msra.mxu0 0
      %294 = vmatprep.subr.bf16.mxu0 0
      %295 = vmatpush1.bf16.msra.mxu0 0
      %296 = vmatprep.subr.bf16.mxu0 0
      %297 = vmatpush1.bf16.msra.mxu0 0
      %298 = vmatprep.subr.bf16.mxu0 0
      %299 = vmatpush1.bf16.msra.mxu0 0
      %300 = vmatprep.subr.bf16.mxu0 0
      %301 = vmatpush1.bf16.msra.mxu0 0
      %302 = vmatprep.subr.bf16.mxu0 0
      %303 = vmatpush1.bf16.msra.mxu0 0
      %304 = vmatprep.subr.bf16.mxu0 0
      %305 = vmatpush1.bf16.msra.mxu0 0
      %306 = vmatprep.mubr.bf16.mxu0 0
      %307 = vmatmul.mubr.bf16.gmra.mrb[0].mxu0 %v272
      %v308 = vpop.f32.mrb[0].mxu0
      %v309 = vadd.f32 0.0, %v308
      %v310 = vpop.f32.mrb[0].mxu0
      %v311 = vpop.f32.mrb[0].mxu0
      %v312 = vadd.f32 0.0, %v311
      %v313 = vpop.f32.mrb[0].mxu0
      %314 = vdwg.mxu0
      %v317 = vunpack.c.l.b16 %v251
      %v318 = vunpack.c.l.b16 %v252
      %v319 = vpack.c.b16 %v318, %v317
      %v322 = vunpack.c.l.b16 %v253
      %v323 = vunpack.c.l.b16 %v254
      %v324 = vpack.c.b16 %v323, %v322
      %v327 = vsel %vm270, %v319, 0
      %329 = vmatprep.subr.bf16.mxu0 0
      %330 = vmatpush1.bf16.msra.mxu0 %v324
      %331 = vmatprep.subr.bf16.mxu0 0
      %332 = vmatpush1.bf16.msra.mxu0 0
      %333 = vmatprep.subr.bf16.mxu0 0
      %334 = vmatpush1.bf16.msra.mxu0 0
      %335 = vmatprep.subr.bf16.mxu0 0
      %336 = vmatpush1.bf16.msra.mxu0 0
      %337 = vmatprep.subr.bf16.mxu0 0
      %338 = vmatpush1.bf16.msra.mxu0 0
      %339 = vmatprep.subr.bf16.mxu0 0
      %340 = vmatpush1.bf16.msra.mxu0 0
      %341 = vmatprep.subr.bf16.mxu0 0
      %342 = vmatpush1.bf16.msra.mxu0 0
      %343 = vmatprep.subr.bf16.mxu0 0
      %344 = vmatpush1.bf16.msra.mxu0 0
      %345 = vmatprep.subr.bf16.mxu0 0
      %346 = vmatpush1.bf16.msra.mxu0 0
      %347 = vmatprep.subr.bf16.mxu0 0
      %348 = vmatpush1.bf16.msra.mxu0 0
      %349 = vmatprep.subr.bf16.mxu0 0
      %350 = vmatpush1.bf16.msra.mxu0 0
      %351 = vmatprep.subr.bf16.mxu0 0
      %352 = vmatpush1.bf16.msra.mxu0 0
      %353 = vmatprep.subr.bf16.mxu0 0
      %354 = vmatpush1.bf16.msra.mxu0 0
      %355 = vmatprep.subr.bf16.mxu0 0
      %356 = vmatpush1.bf16.msra.mxu0 0
      %357 = vmatprep.subr.bf16.mxu0 0
      %358 = vmatpush1.bf16.msra.mxu0 0
      %359 = vmatprep.subr.bf16.mxu0 0
      %360 = vmatpush1.bf16.msra.mxu0 0
      %361 = vmatprep.mubr.bf16.mxu0 0
      %362 = vmatmul.mubr.bf16.gmra.mrb[0].mxu0 %v327
      %v363 = vpop.f32.mrb[0].mxu0
      %v364 = vadd.f32 %v309, %v363
      %v365 = vpop.f32.mrb[0].mxu0
      %v366 = vpop.f32.mrb[0].mxu0
      %v367 = vadd.f32 %v312, %v366
      %v368 = vpop.f32.mrb[0].mxu0
      %369 = vdwg.mxu0
      %v370 = vld [vmem:[%s4] sm:$0x1]
      %v372 = vlaneseq
      %v373 = vshrl.u32 %v372, 7
      %v374 = vsub.s32 0, %v373
      %v375 = vrot.slane %v370, %v374
      %v377 = vadd.f32 %v364, %v375
      %v378 = vadd.f32 %v367, %v375
      %379 = vst.msk [vmem:[%s248] sm:$0xff] %vm270, %v377
      %380 = vst.msk [vmem:[%s248 + $0x8] sm:$0xff] %vm270, %v378
      %s381 = smul.u32 2, %s16
      %p382 = scmp.lt.s32.totalorder %s381, 3
      %s383 = scalar_select %p382, %s381, 3
      %s384 = smul.addr %s383, 8
      %s385 = scalar_lea.vmem %s5, %s384
      // Predicated region
      $region41: #{tpu_custom_call.1} parent=39 // pred_check
        %p386 = pneg %p149
      $region42: #{tpu_custom_call.1} parent=39 // pred_check_branch
        %388 = sbr.rel (%p386) target = $region44
      $region43: #{tpu_custom_call.1} parent=39 // pred_region
        %s389 = smul.u32 2, %s16
      $region44: #{tpu_custom_call.1} parent=39 // pred_fallthru
        _
    $region40: #{tpu_custom_call.1} parent=5 // pred_fallthru
      _
    %p390 = scmp.le.s32.totalorder 2, %s11
    // Predicated region
    $region45: #{tpu_custom_call.1} parent=5 // pred_check
      %p391 = pneg %p390
    $region46: #{tpu_custom_call.1} parent=5 // pred_check_branch
      %393 = sbr.rel (%p391) target = $region48
    $region47: #{tpu_custom_call.1} parent=5 // pred_region
      %s394 = ssub.s32 %s11, 2
      // Predicated region
      $region49: #{tpu_custom_call.1} parent=47 // pred_check
        %p395 = pneg %p155
      $region50: #{tpu_custom_call.1} parent=47 // pred_check_branch
        %397 = sbr.rel (%p395) target = $region52
      $region51: #{tpu_custom_call.1} parent=47 // pred_region
        %s398 = smul.u32 2, %s17
        %p399 = scmp.lt.s32.totalorder %s398, 3
        %s400 = scalar_select %p399, %s398, 3
        %s401 = smul.addr %s400, 8
        %s402 = scalar_lea.vmem %s5, %s401
      $region52: #{tpu_custom_call.1} parent=47 // pred_fallthru
        _
    $region48: #{tpu_custom_call.1} parent=5 // pred_fallthru
      _
  $region6: #{tpu_custom_call.1} parent=0 // loop_footer
    %s15 = sadd.s32 1, %s11
  $region7: #{tpu_custom_call.1} parent=0 // loop_footer_branch
    %10 = sbr.rel target = $region3
  $region8: #{tpu_custom_call.1} parent=0 // loop_exit
    _

// kernel: tpu_custom_call.1
$region0: #{tpu_custom_call.1}
  #allocation0 [shape = 'u32[]', space=smem, size = 0x4, offset = 0x4, fixed_abs, tag = 'smem constant byte address 0x4 - core index']
  #allocation1 [shape = 'u32[144,128]{1,0:T(1,128)}', space=vmem, size = 0x12000, scoped, tag = 'internal scratch']
  %s0 = inlined_call_operand.vmem [shape: bf16[32,16], index: 0, kind: input, shape index: {}]
  %s1 = inlined_call_operand.vmem [shape: bf16[32,16], index: 1, kind: input, shape index: {}]
  %s2 = inlined_call_operand.vmem [shape: bf16[16,16], index: 2, kind: input, shape index: {}]
  %s3 = inlined_call_operand.vmem [shape: bf16[16,16], index: 3, kind: input, shape index: {}]
  %s4 = inlined_call_operand.vmem [shape: f32[1,16], index: 4, kind: input, shape index: {}]
  %s5 = inlined_call_operand.vmem [shape: f32[32,16], index: 5, kind: output, shape index: {}]
  %s6 = sld [smem:[#allocation0]]
  $region53: #{tpu_custom_call.1} parent=0
    _
  %s8 = ssub.s32 1, %s6
  %s9 = scalar_select 0, %s8, %s6
  loop: start=0, step=1, limit=4
  $region2: #{tpu_custom_call.1} parent=0 // loop_pre_header
    _
  $region3: #{tpu_custom_call.1} parent=0 // loop_header
    %s11 = sphi 0, %s15
    %p12 = scmp.ge.s32.totalorder %s11, 4
    %s21 = sphi 0, %s23
    %s24 = sphi 0, %s21
    %s25 = sphi 0, %s24
    %s41 = sphi 0, %s25
    %s47 = sphi 0, %s49
    %s50 = sphi 0, %s47
    %s51 = sphi 0, %s50
    %s67 = sphi 0, %s51
    %s71 = sphi 0, %s71
    %s73 = sphi 0, %s71
    %s74 = sphi 0, %s73
    %s88 = sphi 0, %s74
    %s92 = sphi 0, %s92
    %s94 = sphi 0, %s92
    %s95 = sphi 0, %s94
    %s109 = sphi 0, %s95
    %s113 = sphi 0, %s113
    %s115 = sphi 0, %s113
    %s116 = sphi 0, %s115
    %s130 = sphi 0, %s116
    %s136 = sphi 0, %s138
    %s139 = sphi 0, %s136
    %s140 = sphi 0, %s139
    %s156 = sphi 0, %s140
  $region4: #{tpu_custom_call.1} parent=0 // loop_header_branch
    %14 = sbr.rel (%p12) target = $region8
  $region5: #{tpu_custom_call.1} parent=0 // loop_body
    %s16 = ssub.s32 %s11, 1
    %s17 = ssub.s32 %s11, 2
    %s18 = sadd.s32 %s11, 1
    %s19 = ssub.s32 %s11, %s18
    %p20 = scmp.eq.s32.totalorder %s19, 0
    %s22 = sadd.s32 %s21, 1
    %s23 = scalar_select %p20, %s21, %s22
    %p26 = pneg %p20
    %p27 = scmp.eq.s32.totalorder %s11, 1
    %p28 = por %p26, %p27
    %p29 = scmp.ne.s32.totalorder %s21, %s24
    %p30 = scmp.eq.s32.totalorder %s11, 0
    %p31 = por %p29, %p30
    %p32 = scmp.ne.s32.totalorder %s21, %s24
    %p33 = scmp.eq.s32.totalorder %s16, 1
    %p34 = por %p32, %p33
    %p35 = scmp.ne.s32.totalorder %s24, %s25
    %p36 = scmp.eq.s32.totalorder %s16, 0
    %p37 = por %p35, %p36
    %p38 = scmp.ne.s32.totalorder %s24, %s25
    %p39 = scmp.eq.s32.totalorder %s17, 1
    %p40 = por %p38, %p39
    %p42 = scmp.ne.s32.totalorder %s25, %s41
    %p43 = scmp.eq.s32.totalorder %s17, 0
    %p44 = por %p42, %p43
    %s45 = ssub.s32 %s11, %s18
    %p46 = scmp.eq.s32.totalorder %s45, 0
    %s48 = sadd.s32 %s47, 1
    %s49 = scalar_select %p46, %s47, %s48
    %p52 = pneg %p46
    %p53 = scmp.eq.s32.totalorder %s11, 1
    %p54 = por %p52, %p53
    %p55 = scmp.ne.s32.totalorder %s47, %s50
    %p56 = scmp.eq.s32.totalorder %s11, 0
    %p57 = por %p55, %p56
    %p58 = scmp.ne.s32.totalorder %s47, %s50
    %p59 = scmp.eq.s32.totalorder %s16, 1
    %p60 = por %p58, %p59
    %p61 = scmp.ne.s32.totalorder %s50, %s51
    %p62 = scmp.eq.s32.totalorder %s16, 0
    %p63 = por %p61, %p62
    %p64 = scmp.ne.s32.totalorder %s50, %s51
    %p65 = scmp.eq.s32.totalorder %s17, 1
    %p66 = por %p64, %p65
    %p68 = scmp.ne.s32.totalorder %s51, %s67
    %p69 = scmp.eq.s32.totalorder %s17, 0
    %p70 = por %p68, %p69
    %s72 = sadd.s32 %s71, 1
    %p75 = scmp.eq.s32.totalorder %s11, 1
    %p76 = scmp.ne.s32.totalorder %s71, %s73
    %p77 = scmp.eq.s32.totalorder %s11, 0
    %p78 = por %p76, %p77
    %p79 = scmp.ne.s32.totalorder %s71, %s73
    %p80 = scmp.eq.s32.totalorder %s16, 1
    %p81 = por %p79, %p80
    %p82 = scmp.ne.s32.totalorder %s73, %s74
    %p83 = scmp.eq.s32.totalorder %s16, 0
    %p84 = por %p82, %p83
    %p85 = scmp.ne.s32.totalorder %s73, %s74
    %p86 = scmp.eq.s32.totalorder %s17, 1
    %p87 = por %p85, %p86
    %p89 = scmp.ne.s32.totalorder %s74, %s88
    %p90 = scmp.eq.s32.totalorder %s17, 0
    %p91 = por %p89, %p90
    %s93 = sadd.s32 %s92, 1
    %p96 = scmp.eq.s32.totalorder %s11, 1
    %p97 = scmp.ne.s32.totalorder %s92, %s94
    %p98 = scmp.eq.s32.totalorder %s11, 0
    %p99 = por %p97, %p98
    %p100 = scmp.ne.s32.totalorder %s92, %s94
    %p101 = scmp.eq.s32.totalorder %s16, 1
    %p102 = por %p100, %p101
    %p103 = scmp.ne.s32.totalorder %s94, %s95
    %p104 = scmp.eq.s32.totalorder %s16, 0
    %p105 = por %p103, %p104
    %p106 = scmp.ne.s32.totalorder %s94, %s95
    %p107 = scmp.eq.s32.totalorder %s17, 1
    %p108 = por %p106, %p107
    %p110 = scmp.ne.s32.totalorder %s95, %s109
    %p111 = scmp.eq.s32.totalorder %s17, 0
    %p112 = por %p110, %p111
    %s114 = sadd.s32 %s113, 1
    %p117 = scmp.eq.s32.totalorder %s11, 1
    %p118 = scmp.ne.s32.totalorder %s113, %s115
    %p119 = scmp.eq.s32.totalorder %s11, 0
    %p120 = por %p118, %p119
    %p121 = scmp.ne.s32.totalorder %s113, %s115
    %p122 = scmp.eq.s32.totalorder %s16, 1
    %p123 = por %p121, %p122
    %p124 = scmp.ne.s32.totalorder %s115, %s116
    %p125 = scmp.eq.s32.totalorder %s16, 0
    %p126 = por %p124, %p125
    %p127 = scmp.ne.s32.totalorder %s115, %s116
    %p128 = scmp.eq.s32.totalorder %s17, 1
    %p129 = por %p127, %p128
    %p131 = scmp.ne.s32.totalorder %s116, %s130
    %p132 = scmp.eq.s32.totalorder %s17, 0
    %p133 = por %p131, %p132
    %s134 = ssub.s32 %s11, %s18
    %p135 = scmp.eq.s32.totalorder %s134, 0
    %s137 = sadd.s32 %s136, 1
    %s138 = scalar_select %p135, %s136, %s137
    %p141 = pneg %p135
    %p142 = scmp.eq.s32.totalorder %s11, 1
    %p143 = por %p141, %p142
    %p144 = scmp.ne.s32.totalorder %s136, %s139
    %p145 = scmp.eq.s32.totalorder %s11, 0
    %p146 = por %p144, %p145
    %p147 = scmp.ne.s32.totalorder %s136, %s139
    %p148 = scmp.eq.s32.totalorder %s16, 1
    %p149 = por %p147, %p148
    %p150 = scmp.ne.s32.totalorder %s139, %s140
    %p151 = scmp.eq.s32.totalorder %s16, 0
    %p152 = por %p150, %p151
    %p153 = scmp.ne.s32.totalorder %s139, %s140
    %p154 = scmp.eq.s32.totalorder %s17, 1
    %p155 = por %p153, %p154
    %p157 = scmp.ne.s32.totalorder %s140, %s156
    %p158 = scmp.eq.s32.totalorder %s17, 0
    %p159 = por %p157, %p158
    %p160 = scmp.le.s32.totalorder 1, %s11
    %p161 = scmp.lt.s32.totalorder %s11, 3
    %p162 = pnand %p160, %p161
    %p163 = pneg %p162
    // Predicated region
    $region9: #{tpu_custom_call.1} parent=5 // pred_check
      _
    $region10: #{tpu_custom_call.1} parent=5 // pred_check_branch
      %165 = sbr.rel (%p162) target = $region12
    $region11: #{tpu_custom_call.1} parent=5 // pred_region
      %s166 = ssub.s32 %s11, 1
      // Predicated region
      $region13: #{tpu_custom_call.1} parent=11 // pred_check
        %p167 = pneg %p84
      $region14: #{tpu_custom_call.1} parent=11 // pred_check_branch
        %169 = sbr.rel (%p167) target = $region16
      $region15: #{tpu_custom_call.1} parent=11 // pred_region
        _
      $region16: #{tpu_custom_call.1} parent=11 // pred_fallthru
        _
      // Predicated region
      $region17: #{tpu_custom_call.1} parent=11 // pred_check
        %p170 = pneg %p105
      $region18: #{tpu_custom_call.1} parent=11 // pred_check_branch
        %172 = sbr.rel (%p170) target = $region20
      $region19: #{tpu_custom_call.1} parent=11 // pred_region
        _
      $region20: #{tpu_custom_call.1} parent=11 // pred_fallthru
        _
      // Predicated region
      $region21: #{tpu_custom_call.1} parent=11 // pred_check
        %p173 = pneg %p126
      $region22: #{tpu_custom_call.1} parent=11 // pred_check_branch
        %175 = sbr.rel (%p173) target = $region24
      $region23: #{tpu_custom_call.1} parent=11 // pred_region
        _
      $region24: #{tpu_custom_call.1} parent=11 // pred_fallthru
        _
    $region12: #{tpu_custom_call.1} parent=5 // pred_fallthru
      _
    %p176 = scmp.lt.s32.totalorder %s11, 2
    // Predicated region
    $region25: #{tpu_custom_call.1} parent=5 // pred_check
      %p177 = pneg %p176
    $region26: #{tpu_custom_call.1} parent=5 // pred_check_branch
      %179 = sbr.rel (%p177) target = $region28
    $region27: #{tpu_custom_call.1} parent=5 // pred_region
      // Predicated region
      $region29: #{tpu_custom_call.1} parent=27 // pred_check
        %p180 = pneg %p31
      $region30: #{tpu_custom_call.1} parent=27 // pred_check_branch
        %182 = sbr.rel (%p180) target = $region32
      $region31: #{tpu_custom_call.1} parent=27 // pred_region
        %s183 = smul.u32 2, %s11
        %p184 = scmp.lt.s32.totalorder %s183, 3
        %s185 = scalar_select %p184, %s183, 3
        %s186 = smul.addr %s185, 4
        %s187 = scalar_lea.vmem %s0, %s186
        %s188 = smul.u32 2, %s11
      $region32: #{tpu_custom_call.1} parent=27 // pred_fallthru
        _
      // Predicated region
      $region33: #{tpu_custom_call.1} parent=27 // pred_check
        %p189 = pneg %p57
      $region34: #{tpu_custom_call.1} parent=27 // pred_check_branch
        %191 = sbr.rel (%p189) target = $region36
      $region35: #{tpu_custom_call.1} parent=27 // pred_region
        %s192 = smul.u32 2, %s11
        %p193 = scmp.lt.s32.totalorder %s192, 3
        %s194 = scalar_select %p193, %s192, 3
        %s195 = smul.addr %s194, 4
        %s196 = scalar_lea.vmem %s1, %s195
        %s197 = smul.u32 2, %s11
      $region36: #{tpu_custom_call.1} parent=27 // pred_fallthru
        _
    $region28: #{tpu_custom_call.1} parent=5 // pred_fallthru
      _
    %p198 = scmp.le.s32.totalorder 1, %s11
    %p199 = scmp.lt.s32.totalorder %s11, 3
    %p200 = pnand %p198, %p199
    %p201 = pneg %p200
    // Predicated region
    $region37: #{tpu_custom_call.1} parent=5 // pred_check
      _
    $region38: #{tpu_custom_call.1} parent=5 // pred_check_branch
      %203 = sbr.rel (%p200) target = $region40
    $region39: #{tpu_custom_call.1} parent=5 // pred_region
      %s204 = ssub.s32 %s11, 1
      %s205 = smul.u32 2, %s16
      %p206 = scmp.lt.s32.totalorder %s205, 3
      %s207 = scalar_select %p206, %s205, 3
      %s208 = smul.addr %s207, 4
      %s209 = scalar_lea.vmem %s0, %s208
      %p210 = pneg %p37
      %p211 = pneg %p34
      %s212 = smul.u32 2, %s16
      %p213 = scmp.lt.s32.totalorder %s212, 3
      %s214 = scalar_select %p213, %s212, 3
      %s215 = smul.addr %s214, 4
      %s216 = scalar_lea.vmem %s1, %s215
      %p217 = pneg %p63
      %p218 = pneg %p60
      %p219 = pneg %p84
      %p220 = pneg %p81
      %p221 = pneg %p105
      %p222 = pneg %p102
      %p223 = pneg %p126
      %p224 = pneg %p123
      %p225 = pneg %p152
      %p226 = pneg %p149
      %s227 = smul.u32 2, %s16
      %p228 = scmp.lt.s32.totalorder %s227, 3
      %s229 = scalar_select %p228, %s227, 3
      %s230 = smul.addr %s229, 8
      %s231 = scalar_lea.vmem %s5, %s230
      %s232 = smul.u32 2, %s16
      %p233 = scmp.lt.s32.totalorder %s232, 3
      %s234 = scalar_select %p233, %s232, 3
      %s235 = smul.addr %s234, 4
      %s236 = scalar_lea.vmem %s0, %s235
      %s237 = smul.u32 2, %s16
      %s238 = smul.u32 2, %s16
      %p239 = scmp.lt.s32.totalorder %s238, 3
      %s240 = scalar_select %p239, %s238, 3
      %s241 = smul.addr %s240, 4
      %s242 = scalar_lea.vmem %s1, %s241
      %s243 = smul.u32 2, %s16
      %s244 = smul.u32 2, %s16
      %p245 = scmp.lt.s32.totalorder %s244, 3
      %s246 = scalar_select %p245, %s244, 3
      %s247 = smul.addr %s246, 8
      %s248 = scalar_lea.vmem %s5, %s247
      %s249 = smul.u32 2, %s16
      %v251 = vld [vmem:[%s236] sm:$0xf]
      %v252 = vld [vmem:[%s236 + $0x4] sm:$0xf]
      %v253 = vld [vmem:[%s2] sm:$0xf]
      %v254 = vld [vmem:[%s2 + $0x4] sm:$0xf]
      %v255 = vld [vmem:[%s242] sm:$0xf]
      %v256 = vld [vmem:[%s242 + $0x4] sm:$0xf]
      %v257 = vld [vmem:[%s3] sm:$0xf]
      %v258 = vld [vmem:[%s3 + $0x4] sm:$0xf]
      %v261 = vunpack.c.l.b16 %v255
      %v262 = vunpack.c.l.b16 %v256
      %v263 = vpack.c.b16 %v262, %v261
      %v266 = vunpack.c.l.b16 %v257
      %v267 = vunpack.c.l.b16 %v258
      %v268 = vpack.c.b16 %v267, %v266
      %vm270 = vcmask 130048
      %v272 = vsel %vm270, %v263, 0
      %274 = vmatprep.subr.bf16.mxu0 0
      %275 = vmatpush1.bf16.msra.mxu0 %v268
      %276 = vmatprep.subr.bf16.mxu0 0
      %277 = vmatpush1.bf16.msra.mxu0 0
      %278 = vmatprep.subr.bf16.mxu0 0
      %279 = vmatpush1.bf16.msra.mxu0 0
      %280 = vmatprep.subr.bf16.mxu0 0
      %281 = vmatpush1.bf16.msra.mxu0 0
      %282 = vmatprep.subr.bf16.mxu0 0
      %283 = vmatpush1.bf16.msra.mxu0 0
      %284 = vmatprep.subr.bf16.mxu0 0
      %285 = vmatpush1.bf16.msra.mxu0 0
      %286 = vmatprep.subr.bf16.mxu0 0
      %287 = vmatpush1.bf16.msra.mxu0 0
      %288 = vmatprep.subr.bf16.mxu0 0
      %289 = vmatpush1.bf16.msra.mxu0 0
      %290 = vmatprep.subr.bf16.mxu0 0
      %291 = vmatpush1.bf16.msra.mxu0 0
      %292 = vmatprep.subr.bf16.mxu0 0
      %293 = vmatpush1.bf16.msra.mxu0 0
      %294 = vmatprep.subr.bf16.mxu0 0
      %295 = vmatpush1.bf16.msra.mxu0 0
      %296 = vmatprep.subr.bf16.mxu0 0
      %297 = vmatpush1.bf16.msra.mxu0 0
      %298 = vmatprep.subr.bf16.mxu0 0
      %299 = vmatpush1.bf16.msra.mxu0 0
      %300 = vmatprep.subr.bf16.mxu0 0
      %301 = vmatpush1.bf16.msra.mxu0 0
      %302 = vmatprep.subr.bf16.mxu0 0
      %303 = vmatpush1.bf16.msra.mxu0 0
      %304 = vmatprep.subr.bf16.mxu0 0
      %305 = vmatpush1.bf16.msra.mxu0 0
      %306 = vmatprep.mubr.bf16.mxu0 0
      %307 = vmatmul.mubr.bf16.gmra.mrb[0].mxu0 %v272
      %v308 = vpop.f32.mrb[0].mxu0
      %v309 = vadd.f32 0.0, %v308
      %v310 = vpop.f32.mrb[0].mxu0
      %v311 = vpop.f32.mrb[0].mxu0
      %v312 = vadd.f32 0.0, %v311
      %v313 = vpop.f32.mrb[0].mxu0
      %314 = vdwg.mxu0
      %v317 = vunpack.c.l.b16 %v251
      %v318 = vunpack.c.l.b16 %v252
      %v319 = vpack.c.b16 %v318, %v317
      %v322 = vunpack.c.l.b16 %v253
      %v323 = vunpack.c.l.b16 %v254
      %v324 = vpack.c.b16 %v323, %v322
      %v327 = vsel %vm270, %v319, 0
      %329 = vmatprep.subr.bf16.mxu0 0
      %330 = vmatpush1.bf16.msra.mxu0 %v324
      %331 = vmatprep.subr.bf16.mxu0 0
      %332 = vmatpush1.bf16.msra.mxu0 0
      %333 = vmatprep.subr.bf16.mxu0 0
      %334 = vmatpush1.bf16.msra.mxu0 0
      %335 = vmatprep.subr.bf16.mxu0 0
      %336 = vmatpush1.bf16.msra.mxu0 0
      %337 = vmatprep.subr.bf16.mxu0 0
      %338 = vmatpush1.bf16.msra.mxu0 0
      %339 = vmatprep.subr.bf16.mxu0 0
      %340 = vmatpush1.bf16.msra.mxu0 0
      %341 = vmatprep.subr.bf16.mxu0 0
      %342 = vmatpush1.bf16.msra.mxu0 0
      %343 = vmatprep.subr.bf16.mxu0 0
      %344 = vmatpush1.bf16.msra.mxu0 0
      %345 = vmatprep.subr.bf16.mxu0 0
      %346 = vmatpush1.bf16.msra.mxu0 0
      %347 = vmatprep.subr.bf16.mxu0 0
      %348 = vmatpush1.bf16.msra.mxu0 0
      %349 = vmatprep.subr.bf16.mxu0 0
      %350 = vmatpush1.bf16.msra.mxu0 0
      %351 = vmatprep.subr.bf16.mxu0 0
      %352 = vmatpush1.bf16.msra.mxu0 0
      %353 = vmatprep.subr.bf16.mxu0 0
      %354 = vmatpush1.bf16.msra.mxu0 0
      %355 = vmatprep.subr.bf16.mxu0 0
      %356 = vmatpush1.bf16.msra.mxu0 0
      %357 = vmatprep.subr.bf16.mxu0 0
      %358 = vmatpush1.bf16.msra.mxu0 0
      %359 = vmatprep.subr.bf16.mxu0 0
      %360 = vmatpush1.bf16.msra.mxu0 0
      %361 = vmatprep.mubr.bf16.mxu0 0
      %362 = vmatmul.mubr.bf16.gmra.mrb[0].mxu0 %v327
      %v363 = vpop.f32.mrb[0].mxu0
      %v364 = vadd.f32 %v309, %v363
      %v365 = vpop.f32.mrb[0].mxu0
      %v366 = vpop.f32.mrb[0].mxu0
      %v367 = vadd.f32 %v312, %v366
      %v368 = vpop.f32.mrb[0].mxu0
      %369 = vdwg.mxu0
      %v370 = vld [vmem:[%s4] sm:$0x1]
      %v372 = vlaneseq
      %v373 = vshrl.u32 %v372, 7
      %v374 = vsub.s32 0, %v373
      %v375 = vrot.slane %v370, %v374
      %v377 = vadd.f32 %v364, %v375
      %v378 = vadd.f32 %v367, %v375
      %379 = vst.msk [vmem:[%s248] sm:$0xff] %vm270, %v377
      %380 = vst.msk [vmem:[%s248 + $0x8] sm:$0xff] %vm270, %v378
      %s381 = smul.u32 2, %s16
      %p382 = scmp.lt.s32.totalorder %s381, 3
      %s383 = scalar_select %p382, %s381, 3
      %s384 = smul.addr %s383, 8
      %s385 = scalar_lea.vmem %s5, %s384
      // Predicated region
      $region41: #{tpu_custom_call.1} parent=39 // pred_check
        %p386 = pneg %p149
      $region42: #{tpu_custom_call.1} parent=39 // pred_check_branch
        %388 = sbr.rel (%p386) target = $region44
      $region43: #{tpu_custom_call.1} parent=39 // pred_region
        %s389 = smul.u32 2, %s16
      $region44: #{tpu_custom_call.1} parent=39 // pred_fallthru
        _
    $region40: #{tpu_custom_call.1} parent=5 // pred_fallthru
      _
    %p390 = scmp.le.s32.totalorder 2, %s11
    // Predicated region
    $region45: #{tpu_custom_call.1} parent=5 // pred_check
      %p391 = pneg %p390
    $region46: #{tpu_custom_call.1} parent=5 // pred_check_branch
      %393 = sbr.rel (%p391) target = $region48
    $region47: #{tpu_custom_call.1} parent=5 // pred_region
      %s394 = ssub.s32 %s11, 2
      // Predicated region
      $region49: #{tpu_custom_call.1} parent=47 // pred_check
        %p395 = pneg %p155
      $region50: #{tpu_custom_call.1} parent=47 // pred_check_branch
        %397 = sbr.rel (%p395) target = $region52
      $region51: #{tpu_custom_call.1} parent=47 // pred_region
        %s398 = smul.u32 2, %s17
        %p399 = scmp.lt.s32.totalorder %s398, 3
        %s400 = scalar_select %p399, %s398, 3
        %s401 = smul.addr %s400, 8
        %s402 = scalar_lea.vmem %s5, %s401
      $region52: #{tpu_custom_call.1} parent=47 // pred_fallthru
        _
    $region48: #{tpu_custom_call.1} parent=5 // pred_fallthru
      _
  $region6: #{tpu_custom_call.1} parent=0 // loop_footer
    %s15 = sadd.s32 1, %s11
  $region7: #{tpu_custom_call.1} parent=0 // loop_footer_branch
    %10 = sbr.rel target = $region3
  $region8: #{tpu_custom_call.1} parent=0 // loop_exit
    _

</llo_original>
